<compile_context>
chip_gen: v7x
topology: tpu7x:2x2x1
jax: 0.10.0
libtpu: 0.0.40
codegen_flags: <defaults>
</compile_context>

<pallas_src>
import functools

import jax
import jax.numpy as jnp
from jax.experimental import pallas as pl
from jax.experimental.pallas import tpu as pltpu


def _distill_kernel(out_ref, tgt_ref, loss_ref, *, full_b):
    """Accumulate the fully-normalized partial loss of one (M, TB, C) tile."""
    j = pl.program_id(1)  # batch-tile index within this core's range (reduction axis)

    @pl.when(j == 0)
    def _init():
        loss_ref[...] = jnp.zeros_like(loss_ref)

    o = out_ref[...].astype(jnp.float32)        # (M, TB, C) -- compute in f32
    t = tgt_ref[...]                            # (TB, 1) int32 class indices
    n_mdl, n_b, n_cls = o.shape

    # ---- CrossEntropyLoss(outputs[i], target): sum over (i, rows) of lse - o[tgt]
    row_max = jnp.max(o, axis=-1, keepdims=True)
    lse = jnp.log(jnp.sum(jnp.exp(o - row_max), axis=-1, keepdims=True)) + row_max
    classes = jax.lax.broadcasted_iota(jnp.int32, (n_b, n_cls), 1)       # (TB, C)
    sel = classes == t                                                   # (TB, C) bool
    picked = jnp.sum(jnp.where(sel[None, :, :], o, 0.0), axis=-1, keepdims=True)
    ce_sum = jnp.sum(lse - picked)

    # ---- KLDivLoss(mean_{j!=i} outputs[j], outputs[i]) on RAW tensors, folded:
    #   sum_i sum_{b,c} [xlogy(o_i,o_i) - o_i*(s - o_i)/(M-1)]
    #     = sum xlogy(o,o) - (sum s^2 - sum o^2)/(M-1),   s = sum_i o_i
    s = jnp.sum(o, axis=0)                                               # (TB, C)
    xlogy_sum = jnp.sum(jnp.where(o == 0.0, 0.0, o * jnp.log(o)))
    cross_sum = (jnp.sum(s * s) - jnp.sum(o * o)) / (n_mdl - 1)
    kl_sum = xlogy_sum - cross_sum

    # Normalizations (1/B for CE, 1/(B*C) for KL, 1/M overall) are linear, so
    # fold them per tile; the accumulator is then just a running sum.
    partial = (ce_sum / full_b + kl_sum / (full_b * n_cls)) / n_mdl
    loss_ref[...] += partial                     # scalar broadcast over (1, 8, 128)


def _choose_tb(n_models, batch, n_cls, itemsize):
    """Largest batch tile keeping one input buffer under a conservative VMEM
    budget (sized for v7x's 64 MiB/TC with double buffering) and respecting the
    sublane tiling rule for the dtype (8 rows f32, 16 bf16, 32 int8)."""
    sub = max(8, 32 // itemsize)
    budget = 8 * 1024 * 1024  # bytes per input buffer (x2 for double buffering)
    if batch % sub != 0:
        return batch  # a full-dim block is always legal
    cands = [batch] + [t for t in (1024, 512, 256, 128, 64, 32, 16, 8)
                       if t % sub == 0 and batch % t == 0]
    for t in cands:
        if n_models * t * n_cls * itemsize <= budget:
            return t
    return sub


def online_distillation_loss(outputs, target, *, tb=None):
    """outputs: (M, B, C) logits (any float dtype); target: (B,) int class indices."""
    M, B, C = outputs.shape
    if M < 2:
        raise ValueError("online distillation loss must have at least 2 outputs")

    itemsize = jnp.dtype(outputs.dtype).itemsize
    sub = max(8, 32 // itemsize)
    if tb is None:
        tb = _choose_tb(M, B, C, itemsize)
    if B % tb != 0 or not (tb == B or tb % sub == 0):
        raise ValueError(f"invalid batch tile {tb} for B={B}, dtype={outputs.dtype}")

    nbt = B // tb                       # number of batch tiles
    ncores = 2 if nbt % 2 == 0 else 1   # split across v7x's 2 TCs when possible
    npc = nbt // ncores                 # batch tiles per core

    tgt2d = target.astype(jnp.int32).reshape(B, 1)
    kernel = functools.partial(_distill_kernel, full_b=B)

    partials = pl.pallas_call(
        kernel,
        out_shape=jax.ShapeDtypeStruct((ncores, 8, 128), jnp.float32),
        grid=(ncores, npc),
        in_specs=[
            # native dtype in HBM; cast to f32 per tile inside the kernel
            pl.BlockSpec((M, tb, C), lambda c, j: (0, c * npc + j, 0)),
            pl.BlockSpec((tb, 1), lambda c, j: (c * npc + j, 0)),
        ],
        # per-core resident accumulator block (constant index along j)
        out_specs=pl.BlockSpec((1, 8, 128), lambda c, j: (c, 0, 0)),
        compiler_params=pltpu.CompilerParams(
            dimension_semantics=("parallel", "arbitrary")),
    )(outputs, tgt2d)

    # every lane of a core's block holds that core's partial; sum lane 0 per core
    return jnp.sum(partials[:, 0, 0])


def reference_loss(outputs, target):
    """Pure-JAX reference mirroring the PyTorch forward."""
    M, B, C = outputs.shape
    onehot = jax.nn.one_hot(target, C, dtype=jnp.float32)
    lse = jax.scipy.special.logsumexp(outputs, axis=-1)                  # (M,B)
    picked = jnp.sum(outputs * onehot[None], axis=-1)                    # (M,B)
    ce = jnp.mean(lse - picked, axis=-1)                                 # (M,)
    s = jnp.sum(outputs, axis=0, keepdims=True)
    other_mean = (s - outputs) / (M - 1)
    xlogy = jnp.where(outputs == 0.0, 0.0, outputs * jnp.log(outputs))
    kl = jnp.mean(xlogy - outputs * other_mean, axis=(1, 2))             # (M,)
    return jnp.sum(ce + kl) / M


if __name__ == "__main__":
    key = jax.random.PRNGKey(0)
    M, B, C = 3, 32, 128  # 3 peer models, batch 32, 128 classes
    k1, k2 = jax.random.split(key)
    # Positive "logits" keep torch's xlogy(target, target) finite so the demo
    # value is checkable (negative entries give NaN in PyTorch too; the kernel
    # reproduces that behaviour exactly).
    outputs = jax.random.uniform(k1, (M, B, C), jnp.float32, minval=0.1, maxval=2.0)
    target = jax.random.randint(k2, (B,), 0, C)

    ref = reference_loss(outputs, target)

    # path 1: single-tile (TB = B), single core
    loss_full = online_distillation_loss(outputs, target)
    # path 2: tiled over batch (TB = 8) + 2-way core-parallel split -> grid (2, 2)
    loss_tiled = online_distillation_loss(outputs, target, tb=8)
    # path 3: native bf16 inputs (no wrapper upcast), TB = 16, grid (2, 1)
    outputs_bf16 = outputs.astype(jnp.bfloat16)
    ref_bf16 = reference_loss(outputs_bf16.astype(jnp.float32), target)
    loss_bf16 = online_distillation_loss(outputs_bf16, target, tb=16)

    jax.block_until_ready((loss_full, loss_tiled, loss_bf16))

    assert jnp.allclose(loss_full, ref, rtol=1e-4, atol=1e-4), (loss_full, ref)
    assert jnp.allclose(loss_tiled, ref, rtol=1e-4, atol=1e-4), (loss_tiled, ref)
    assert jnp.allclose(loss_bf16, ref_bf16, rtol=1e-3, atol=1e-3), (loss_bf16, ref_bf16)
    print("KERNEL_OK")
</pallas_src>

<mosaic_0001>
module attributes {stable_mosaic.version = 11 : i64} {
  func.func @_distill_kernel(%arg0: i32, %arg1: i32, %arg2: memref<3x32x128xf32, #tpu.memory_space<vmem>>, %arg3: memref<32x1xi32, #tpu.memory_space<vmem>>, %arg4: memref<1x8x128xf32, #tpu.memory_space<vmem>>) attributes {dimension_semantics = [#tpu.dimension_semantics<parallel>, #tpu.dimension_semantics<arbitrary>], iteration_bounds = array<i64: 1, 1>, scalar_prefetch = 0 : i64, scratch_operands = 0 : i64, tpu.core_type = #tpu.core_type<tc>, window_params = [{transform_indices = @transform_0, window_bounds = array<i64: 3, 32, 128>}, {transform_indices = @transform_1, window_bounds = array<i64: 32, 1>}, {transform_indices = @transform_2, window_bounds = array<i64: 1, 8, 128>}]} {
    %c0_i32 = arith.constant 0 : i32
    %0 = arith.cmpi eq, %arg1, %c0_i32 : i32
    %1 = arith.extui %0 : i1 to i32
    %c0_i32_0 = arith.constant 0 : i32
    %2 = arith.cmpi ne, %1, %c0_i32_0 : i32
    scf.if %2 {
      %cst_25 = arith.constant 0.000000e+00 : f32
      %61 = vector.broadcast %cst_25 : f32 to vector<1x8x128xf32>
      %c0_26 = arith.constant 0 : index
      %c0_27 = arith.constant 0 : index
      %c0_28 = arith.constant 0 : index
      %62 = vector.load %arg4[%c0_26, %c0_27, %c0_28] : memref<1x8x128xf32, #tpu.memory_space<vmem>>, vector<1x8x128xf32>
      tpu.vector_store %arg4[%c0_26, %c0_27, %c0_28], %61 {strides = array<i32>} : memref<1x8x128xf32, #tpu.memory_space<vmem>>, vector<1x8x128xf32>,
    } else {
    }
    %c0 = arith.constant 0 : index
    %c0_1 = arith.constant 0 : index
    %c0_2 = arith.constant 0 : index
    %3 = vector.load %arg2[%c0, %c0_1, %c0_2] : memref<3x32x128xf32, #tpu.memory_space<vmem>>, vector<3x32x128xf32>
    %c0_3 = arith.constant 0 : index
    %c0_4 = arith.constant 0 : index
    %4 = vector.load %arg3[%c0_3, %c0_4] : memref<32x1xi32, #tpu.memory_space<vmem>>, vector<32x1xi32>
    %cst = arith.constant dense<0xFF800000> : vector<3x32xf32>
    %5 = vector.multi_reduction <maximumf>, %3, %cst [2] : vector<3x32x128xf32> to vector<3x32xf32>
    %6 = vector.shape_cast %5 : vector<3x32xf32> to vector<3x32x1xf32>
    %7 = vector.broadcast %6 : vector<3x32x1xf32> to vector<3x32x128xf32>
    %8 = arith.subf %3, %7 : vector<3x32x128xf32>
    %9 = math.exp %8 : vector<3x32x128xf32>
    %cst_5 = arith.constant dense<0.000000e+00> : vector<3x32xf32>
    %10 = vector.multi_reduction <add>, %9, %cst_5 [2] : vector<3x32x128xf32> to vector<3x32xf32>
    %11 = vector.shape_cast %10 : vector<3x32xf32> to vector<3x32x1xf32>
    %12 = math.log %11 : vector<3x32x1xf32>
    %13 = arith.addf %12, %6 : vector<3x32x1xf32>
    %14 = tpu.iota {dimensions = array<i32: 1>} : vector<32x128xi32>
    %15 = vector.broadcast %4 : vector<32x1xi32> to vector<32x128xi32>
    %16 = arith.cmpi eq, %14, %15 : vector<32x128xi32>
    %17 = vector.shape_cast %16 : vector<32x128xi1> to vector<1x32x128xi1>
    %cst_6 = arith.constant 0.000000e+00 : f32
    %18 = vector.shape_cast %17 : vector<1x32x128xi1> to vector<1x32x128xi1>
    %19 = vector.broadcast %18 : vector<1x32x128xi1> to vector<3x32x128xi1>
    %20 = vector.broadcast %cst_6 : f32 to vector<3x32x128xf32>
    %21 = arith.select %19, %3, %20 : vector<3x32x128xi1>, vector<3x32x128xf32>
    %cst_7 = arith.constant dense<0.000000e+00> : vector<3x32xf32>
    %22 = vector.multi_reduction <add>, %21, %cst_7 [2] : vector<3x32x128xf32> to vector<3x32xf32>
    %23 = vector.shape_cast %22 : vector<3x32xf32> to vector<3x32x1xf32>
    %24 = arith.subf %13, %23 : vector<3x32x1xf32>
    %25 = vector.shape_cast %24 : vector<3x32x1xf32> to vector<1x3x32x1xf32>
    %cst_8 = arith.constant dense<0.000000e+00> : vector<1xf32>
    %26 = vector.multi_reduction <add>, %25, %cst_8 [1, 2, 3] : vector<1x3x32x1xf32> to vector<1xf32>
    %27 = vector.shape_cast %26 : vector<1xf32> to vector<1x1x1x1xf32>
    %28 = vector.extract %27[0, 0, 0, 0] : f32 from vector<1x1x1x1xf32>
    %cst_9 = arith.constant dense<0.000000e+00> : vector<32x128xf32>
    %29 = vector.multi_reduction <add>, %3, %cst_9 [0] : vector<3x32x128xf32> to vector<32x128xf32>
    %cst_10 = arith.constant 0.000000e+00 : f32
    %30 = vector.broadcast %cst_10 : f32 to vector<3x32x128xf32>
    %31 = arith.cmpf oeq, %3, %30 : vector<3x32x128xf32>
    %32 = math.log %3 : vector<3x32x128xf32>
    %33 = arith.mulf %3, %32 : vector<3x32x128xf32>
    %cst_11 = arith.constant 0.000000e+00 : f32
    %34 = vector.broadcast %cst_11 : f32 to vector<3x32x128xf32>
    %35 = arith.select %31, %34, %33 : vector<3x32x128xi1>, vector<3x32x128xf32>
    %36 = vector.shape_cast %35 : vector<3x32x128xf32> to vector<1x3x32x128xf32>
    %cst_12 = arith.constant dense<0.000000e+00> : vector<1xf32>
    %37 = vector.multi_reduction <add>, %36, %cst_12 [1, 2, 3] : vector<1x3x32x128xf32> to vector<1xf32>
    %38 = vector.shape_cast %37 : vector<1xf32> to vector<1x1x1x1xf32>
    %39 = vector.extract %38[0, 0, 0, 0] : f32 from vector<1x1x1x1xf32>
    %40 = arith.mulf %29, %29 : vector<32x128xf32>
    %41 = vector.shape_cast %40 : vector<32x128xf32> to vector<1x32x128xf32>
    %cst_13 = arith.constant dense<0.000000e+00> : vector<1xf32>
    %42 = vector.multi_reduction <add>, %41, %cst_13 [1, 2] : vector<1x32x128xf32> to vector<1xf32>
    %43 = vector.shape_cast %42 : vector<1xf32> to vector<1x1x1xf32>
    %44 = vector.extract %43[0, 0, 0] : f32 from vector<1x1x1xf32>
    %45 = arith.mulf %3, %3 : vector<3x32x128xf32>
    %46 = vector.shape_cast %45 : vector<3x32x128xf32> to vector<1x3x32x128xf32>
    %cst_14 = arith.constant dense<0.000000e+00> : vector<1xf32>
    %47 = vector.multi_reduction <add>, %46, %cst_14 [1, 2, 3] : vector<1x3x32x128xf32> to vector<1xf32>
    %48 = vector.shape_cast %47 : vector<1xf32> to vector<1x1x1x1xf32>
    %49 = vector.extract %48[0, 0, 0, 0] : f32 from vector<1x1x1x1xf32>
    %50 = arith.subf %44, %49 : f32
    %cst_15 = arith.constant 2.000000e+00 : f32
    %51 = arith.divf %50, %cst_15 : f32
    %52 = arith.subf %39, %51 : f32
    %cst_16 = arith.constant 3.200000e+01 : f32
    %53 = arith.divf %28, %cst_16 : f32
    %cst_17 = arith.constant 4.096000e+03 : f32
    %54 = arith.divf %52, %cst_17 : f32
    %55 = arith.addf %53, %54 : f32
    %cst_18 = arith.constant 3.000000e+00 : f32
    %56 = arith.divf %55, %cst_18 : f32
    %c0_19 = arith.constant 0 : index
    %c0_20 = arith.constant 0 : index
    %c0_21 = arith.constant 0 : index
    %57 = vector.load %arg4[%c0_19, %c0_20, %c0_21] : memref<1x8x128xf32, #tpu.memory_space<vmem>>, vector<1x8x128xf32>
    %58 = vector.broadcast %56 : f32 to vector<1x8x128xf32>
    %59 = arith.addf %57, %58 : vector<1x8x128xf32>
    %c0_22 = arith.constant 0 : index
    %c0_23 = arith.constant 0 : index
    %c0_24 = arith.constant 0 : index
    %60 = vector.load %arg4[%c0_22, %c0_23, %c0_24] : memref<1x8x128xf32, #tpu.memory_space<vmem>>, vector<1x8x128xf32>
    tpu.vector_store %arg4[%c0_22, %c0_23, %c0_24], %59 {strides = array<i32>} : memref<1x8x128xf32, #tpu.memory_space<vmem>>, vector<1x8x128xf32>,
    return
  }
  func.func @transform_0(%arg0: i32, %arg1: i32) -> (i32, i32, i32) {
    %c1_i32 = arith.constant 1 : i32
    %0 = arith.muli %arg0, %c1_i32 : i32
    %1 = arith.addi %0, %arg1 : i32
    %c0_i32 = arith.constant 0 : i32
    %c0_i32_0 = arith.constant 0 : i32
    %c0_i32_1 = arith.constant 0 : i32
    return %c0_i32, %1, %c0_i32_0 : i32, i32, i32
  }
  func.func @transform_1(%arg0: i32, %arg1: i32) -> (i32, i32) {
    %c1_i32 = arith.constant 1 : i32
    %0 = arith.muli %arg0, %c1_i32 : i32
    %1 = arith.addi %0, %arg1 : i32
    %c0_i32 = arith.constant 0 : i32
    %c0_i32_0 = arith.constant 0 : i32
    return %1, %c0_i32 : i32, i32
  }
  func.func @transform_2(%arg0: i32, %arg1: i32) -> (i32, i32, i32) {
    %c0_i32 = arith.constant 0 : i32
    %c0_i32_0 = arith.constant 0 : i32
    %c0_i32_1 = arith.constant 0 : i32
    return %arg0, %c0_i32, %c0_i32_0 : i32, i32, i32
  }
}

</mosaic_0001>

<llo_original>
// kernel: tpu_custom_call.1
$region0: #{tpu_custom_call.1}
  #allocation0 [shape = 'u32[]', space=smem, size = 0x4, offset = 0x4, fixed_abs, tag = 'smem constant byte address 0x4 - core index']
  #allocation1 [shape = 'u32[144,128]{1,0:T(1,128)}', space=vmem, size = 0x12000, scoped, tag = 'internal scratch']
  %s0 = inlined_call_operand.hbm [shape: f32[3,32,128], index: 0, kind: input, shape index: {}]
  %s1 = inlined_call_operand.vmem [shape: s32[32,1], index: 1, kind: input, shape index: {}]
  %s2 = inlined_call_operand.hbm [shape: f32[1,8,128], index: 2, kind: output, shape index: {}]
  %s3 = sld [smem:[#allocation0]]
  $region26: #{tpu_custom_call.1} parent=0
    _
  %s5 = ssub.s32 1, %s3
  %s6 = scalar_select 0, %s5, %s3
  $region1: #{tpu_custom_call.1} parent=0
    #allocation2 [shape = 'u8[49152]{0}', space=vmem, size = 0xc000, scoped, tag = 'input window, operand 0, single buffered']
    #allocation3 [shape = 's32[1]{0}', space=sflag, size = 0x4, scoped, tag = 'scoped memory for tpu_custom_call.1']
    #allocation4 [shape = 's32[1]{0}', space=sflag, size = 0x4, scoped, tag = 'scoped memory for tpu_custom_call.1']
    #allocation5 [shape = 'u8[4096]{0}', space=vmem, size = 0x1000, scoped, tag = 'output window, operand 0, single buffered']
    %7 = vsyncpa [#allocation3], 0
    %8 = vsyncpa [#allocation4], 0
    // Predicated region
    $region2: #{tpu_custom_call.1} parent=1 // pred_check
      _
    $region3: #{tpu_custom_call.1} parent=1 // pred_check_branch
      %10 = sbr.rel (0) target = $region5
    $region4: #{tpu_custom_call.1} parent=1 // pred_region
      %s11 = sadd.s32 0, 0
      %s12 = smul.u32 4, %s11
      %s14 = ssub.s32 1536, 1536
      %15 = vsyncadd [#allocation3], %s14
      %s16 = smul.addr %s12, 128
      %s17 = scalar_lea.hbm %s0, %s16
      %s18 = sshll.u32 [#allocation2], 4
      %s19 = int_to_ptr.vmem [resolvable:$true] %s18
      %24 = dma.hbm_to_vmem [thread:$0]  %s17, 1536, %s19, [#allocation3], 128, 128, 8
    $region5: #{tpu_custom_call.1} parent=1 // pred_fallthru
      _
    // Predicated region
    $region6: #{tpu_custom_call.1} parent=1 // pred_check
      _
    $region7: #{tpu_custom_call.1} parent=1 // pred_check_branch
      %26 = sbr.rel (0) target = $region9
    $region8: #{tpu_custom_call.1} parent=1 // pred_region
      %s27 = sadd.s32 0, 0
      %s28 = smul.u32 4, %s27
      %p29 = scmp.lt.s32.totalorder %s28, 3
      %s30 = scalar_select %p29, %s28, 3
      %s31 = smul.addr %s30, 8
      %s32 = scalar_lea.vmem %s1, %s31
      %s33 = sadd.s32 0, 0
      %s34 = smul.u32 4, %s33
    $region9: #{tpu_custom_call.1} parent=1 // pred_fallthru
      _
    // Predicated region
    $region10: #{tpu_custom_call.1} parent=1 // pred_check
      _
    $region11: #{tpu_custom_call.1} parent=1 // pred_check_branch
      %36 = sbr.rel (0) target = $region13
    $region12: #{tpu_custom_call.1} parent=1 // pred_region
      %37 = dma.done [#allocation3], 1536
    $region13: #{tpu_custom_call.1} parent=1 // pred_fallthru
      _
    %s38 = sadd.s32 0, 0
    %s39 = smul.u32 4, %s38
    %p40 = scmp.lt.s32.totalorder %s39, 3
    %s41 = scalar_select %p40, %s39, 3
    %s42 = smul.addr %s41, 8
    %s43 = scalar_lea.vmem %s1, %s42
    %s44 = sadd.s32 0, 0
    %s45 = smul.u32 4, %s44
    %s46 = sadd.s32 0, 0
    %s47 = smul.u32 4, %s46
    %p48 = scmp.lt.s32.totalorder %s47, 3
    %s49 = scalar_select %p48, %s47, 3
    %s50 = smul.addr %s49, 8
    %s51 = scalar_lea.vmem %s1, %s50
    %s52 = sadd.s32 0, 0
    %s53 = smul.u32 4, %s52
    %p54 = scmp.eq.s32.totalorder 0, 0
    // Predicated region
    $region14: #{tpu_custom_call.1} parent=1 // pred_check
      %p55 = pneg %p54
    $region15: #{tpu_custom_call.1} parent=1 // pred_check_branch
      %57 = sbr.rel (%p55) target = $region17
    $region16: #{tpu_custom_call.1} parent=1 // pred_region
      %58 = vst [vmem:[#allocation5] sm:$0xff] 0.0
    $region17: #{tpu_custom_call.1} parent=1 // pred_fallthru
      _
    %v59 = vld [vmem:[#allocation2] sm:$0xff]
    %v60 = vld [vmem:[#allocation2 + $0x8] sm:$0xff]
    %v61 = vld [vmem:[#allocation2 + $0x10] sm:$0xff]
    %v62 = vld [vmem:[#allocation2 + $0x18] sm:$0xff]
    %v63 = vld [vmem:[#allocation2 + $0x20] sm:$0xff]
    %v64 = vld [vmem:[#allocation2 + $0x28] sm:$0xff]
    %v65 = vld [vmem:[#allocation2 + $0x30] sm:$0xff]
    %v66 = vld [vmem:[#allocation2 + $0x38] sm:$0xff]
    %v67 = vld [vmem:[#allocation2 + $0x40] sm:$0xff]
    %v68 = vld [vmem:[#allocation2 + $0x48] sm:$0xff]
    %v69 = vld [vmem:[#allocation2 + $0x50] sm:$0xff]
    %v70 = vld [vmem:[#allocation2 + $0x58] sm:$0xff]
    %v71 = vld [vmem:[%s51] sm:$0xff]
    %v72 = vld [vmem:[%s51 + $0x8] sm:$0xff]
    %v73 = vld [vmem:[%s51 + $0x10] sm:$0xff]
    %v74 = vld [vmem:[%s51 + $0x18] sm:$0xff]
    %75 = vmax.xlane.f32.xlu0 %v59
    %v76 = vpop.xlane.xlu0 %75
    %77 = vmax.xlane.f32.xlu0 %v60
    %v78 = vpop.xlane.xlu0 %77
    %79 = vmax.xlane.f32.xlu0 %v61
    %v80 = vpop.xlane.xlu0 %79
    %81 = vmax.xlane.f32.xlu0 %v62
    %v82 = vpop.xlane.xlu0 %81
    %83 = vmax.xlane.f32.xlu0 %v63
    %v84 = vpop.xlane.xlu0 %83
    %85 = vmax.xlane.f32.xlu0 %v64
    %v86 = vpop.xlane.xlu0 %85
    %87 = vmax.xlane.f32.xlu0 %v65
    %v88 = vpop.xlane.xlu0 %87
    %89 = vmax.xlane.f32.xlu0 %v66
    %v90 = vpop.xlane.xlu0 %89
    %91 = vmax.xlane.f32.xlu0 %v67
    %v92 = vpop.xlane.xlu0 %91
    %93 = vmax.xlane.f32.xlu0 %v68
    %v94 = vpop.xlane.xlu0 %93
    %95 = vmax.xlane.f32.xlu0 %v69
    %v96 = vpop.xlane.xlu0 %95
    %97 = vmax.xlane.f32.xlu0 %v70
    %v98 = vpop.xlane.xlu0 %97
    %v99 = vsub.f32 %v59, %v76
    %v100 = vsub.f32 %v60, %v78
    %v101 = vsub.f32 %v61, %v80
    %v102 = vsub.f32 %v62, %v82
    %v103 = vsub.f32 %v63, %v84
    %v104 = vsub.f32 %v64, %v86
    %v105 = vsub.f32 %v65, %v88
    %v106 = vsub.f32 %v66, %v90
    %v107 = vsub.f32 %v67, %v92
    %v108 = vsub.f32 %v68, %v94
    %v109 = vsub.f32 %v69, %v96
    %v110 = vsub.f32 %v70, %v98
    %v111 = vmul.f32 %v99, 1.442695
    %v112 = vpow.pop %v111
    %v113 = vmul.f32 %v100, 1.442695
    %v114 = vpow.pop %v113
    %v115 = vmul.f32 %v101, 1.442695
    %v116 = vpow.pop %v115
    %v117 = vmul.f32 %v102, 1.442695
    %v118 = vpow.pop %v117
    %v119 = vmul.f32 %v103, 1.442695
    %v120 = vpow.pop %v119
    %v121 = vmul.f32 %v104, 1.442695
    %v122 = vpow.pop %v121
    %v123 = vmul.f32 %v105, 1.442695
    %v124 = vpow.pop %v123
    %v125 = vmul.f32 %v106, 1.442695
    %v126 = vpow.pop %v125
    %v127 = vmul.f32 %v107, 1.442695
    %v128 = vpow.pop %v127
    %v129 = vmul.f32 %v108, 1.442695
    %v130 = vpow.pop %v129
    %v131 = vmul.f32 %v109, 1.442695
    %v132 = vpow.pop %v131
    %v133 = vmul.f32 %v110, 1.442695
    %v134 = vpow.pop %v133
    %135 = vadd.xlane.f32.xlu0 %v112
    %v136 = vpop.xlane.xlu0 %135
    %137 = vadd.xlane.f32.xlu0 %v114
    %v138 = vpop.xlane.xlu0 %137
    %139 = vadd.xlane.f32.xlu0 %v116
    %v140 = vpop.xlane.xlu0 %139
    %141 = vadd.xlane.f32.xlu0 %v118
    %v142 = vpop.xlane.xlu0 %141
    %143 = vadd.xlane.f32.xlu0 %v120
    %v144 = vpop.xlane.xlu0 %143
    %145 = vadd.xlane.f32.xlu0 %v122
    %v146 = vpop.xlane.xlu0 %145
    %147 = vadd.xlane.f32.xlu0 %v124
    %v148 = vpop.xlane.xlu0 %147
    %149 = vadd.xlane.f32.xlu0 %v126
    %v150 = vpop.xlane.xlu0 %149
    %151 = vadd.xlane.f32.xlu0 %v128
    %v152 = vpop.xlane.xlu0 %151
    %153 = vadd.xlane.f32.xlu0 %v130
    %v154 = vpop.xlane.xlu0 %153
    %155 = vadd.xlane.f32.xlu0 %v132
    %v156 = vpop.xlane.xlu0 %155
    %157 = vadd.xlane.f32.xlu0 %v134
    %v158 = vpop.xlane.xlu0 %157
    %v159 = vlog2.pop %v136
    %v160 = vmul.f32 %v159, 0.6931472
    %v161 = vlog2.pop %v138
    %v162 = vmul.f32 %v161, 0.6931472
    %v163 = vlog2.pop %v140
    %v164 = vmul.f32 %v163, 0.6931472
    %v165 = vlog2.pop %v142
    %v166 = vmul.f32 %v165, 0.6931472
    %v167 = vlog2.pop %v144
    %v168 = vmul.f32 %v167, 0.6931472
    %v169 = vlog2.pop %v146
    %v170 = vmul.f32 %v169, 0.6931472
    %v171 = vlog2.pop %v148
    %v172 = vmul.f32 %v171, 0.6931472
    %v173 = vlog2.pop %v150
    %v174 = vmul.f32 %v173, 0.6931472
    %v175 = vlog2.pop %v152
    %v176 = vmul.f32 %v175, 0.6931472
    %v177 = vlog2.pop %v154
    %v178 = vmul.f32 %v177, 0.6931472
    %v179 = vlog2.pop %v156
    %v180 = vmul.f32 %v179, 0.6931472
    %v181 = vlog2.pop %v158
    %v182 = vmul.f32 %v181, 0.6931472
    %v183 = vadd.f32 %v160, %v76
    %v184 = vadd.f32 %v162, %v78
    %v185 = vadd.f32 %v164, %v80
    %v186 = vadd.f32 %v166, %v82
    %v187 = vadd.f32 %v168, %v84
    %v188 = vadd.f32 %v170, %v86
    %v189 = vadd.f32 %v172, %v88
    %v190 = vadd.f32 %v174, %v90
    %v191 = vadd.f32 %v176, %v92
    %v192 = vadd.f32 %v178, %v94
    %v193 = vadd.f32 %v180, %v96
    %v194 = vadd.f32 %v182, %v98
    %v195 = vlaneseq
    %v196 = vand.u32 %v195, 127
    %197 = vset.pattern.permute.xlu0 0
    %198 = vperm.xlu0 %197, %v71
    %v199 = vpop.permute.xlu0 %198
    %200 = vset.pattern.permute.xlu0 0
    %201 = vperm.xlu0 %200, %v72
    %v202 = vpop.permute.xlu0 %201
    %203 = vset.pattern.permute.xlu0 0
    %204 = vperm.xlu0 %203, %v73
    %v205 = vpop.permute.xlu0 %204
    %206 = vset.pattern.permute.xlu0 0
    %207 = vperm.xlu0 %206, %v74
    %v208 = vpop.permute.xlu0 %207
    %vm209 = vcmp.eq.s32.totalorder %v196, %v199
    %vm210 = vcmp.eq.s32.totalorder %v196, %v202
    %vm211 = vcmp.eq.s32.totalorder %v196, %v205
    %vm212 = vcmp.eq.s32.totalorder %v196, %v208
    %v213 = vsel %vm209, 1, 0
    %v214 = vsel %vm210, 1, 0
    %v215 = vsel %vm211, 1, 0
    %v216 = vsel %vm212, 1, 0
    %vm217 = vcmp.eq.s32.totalorder %v213, 1
    %vm218 = vcmp.eq.s32.totalorder %v214, 1
    %vm219 = vcmp.eq.s32.totalorder %v215, 1
    %vm220 = vcmp.eq.s32.totalorder %v216, 1
    %v221 = vsel %vm217, %v59, 0.0
    %v222 = vsel %vm218, %v60, 0.0
    %v223 = vsel %vm219, %v61, 0.0
    %v224 = vsel %vm220, %v62, 0.0
    %v225 = vsel %vm217, %v63, 0.0
    %v226 = vsel %vm218, %v64, 0.0
    %v227 = vsel %vm219, %v65, 0.0
    %v228 = vsel %vm220, %v66, 0.0
    %v229 = vsel %vm217, %v67, 0.0
    %v230 = vsel %vm218, %v68, 0.0
    %v231 = vsel %vm219, %v69, 0.0
    %v232 = vsel %vm220, %v70, 0.0
    %233 = vadd.xlane.f32.xlu0 %v221
    %v234 = vpop.xlane.xlu0 %233
    %235 = vadd.xlane.f32.xlu0 %v222
    %v236 = vpop.xlane.xlu0 %235
    %237 = vadd.xlane.f32.xlu0 %v223
    %v238 = vpop.xlane.xlu0 %237
    %239 = vadd.xlane.f32.xlu0 %v224
    %v240 = vpop.xlane.xlu0 %239
    %241 = vadd.xlane.f32.xlu0 %v225
    %v242 = vpop.xlane.xlu0 %241
    %243 = vadd.xlane.f32.xlu0 %v226
    %v244 = vpop.xlane.xlu0 %243
    %245 = vadd.xlane.f32.xlu0 %v227
    %v246 = vpop.xlane.xlu0 %245
    %247 = vadd.xlane.f32.xlu0 %v228
    %v248 = vpop.xlane.xlu0 %247
    %249 = vadd.xlane.f32.xlu0 %v229
    %v250 = vpop.xlane.xlu0 %249
    %251 = vadd.xlane.f32.xlu0 %v230
    %v252 = vpop.xlane.xlu0 %251
    %253 = vadd.xlane.f32.xlu0 %v231
    %v254 = vpop.xlane.xlu0 %253
    %255 = vadd.xlane.f32.xlu0 %v232
    %v256 = vpop.xlane.xlu0 %255
    %v257 = vsub.f32 %v183, %v234
    %v258 = vsub.f32 %v184, %v236
    %v259 = vsub.f32 %v185, %v238
    %v260 = vsub.f32 %v186, %v240
    %v261 = vsub.f32 %v187, %v242
    %v262 = vsub.f32 %v188, %v244
    %v263 = vsub.f32 %v189, %v246
    %v264 = vsub.f32 %v190, %v248
    %v265 = vsub.f32 %v191, %v250
    %v266 = vsub.f32 %v192, %v252
    %v267 = vsub.f32 %v193, %v254
    %v268 = vsub.f32 %v194, %v256
    %vm269 = vcmask 7168
    %v270 = vsel %vm269, %v257, 0.0
    %v271 = vsel %vm269, %v258, 0.0
    %v272 = vadd.f32 %v270, %v271
    %v273 = vsel %vm269, %v259, 0.0
    %v274 = vadd.f32 %v272, %v273
    %v275 = vsel %vm269, %v260, 0.0
    %v276 = vadd.f32 %v274, %v275
    %v277 = vsel %vm269, %v261, 0.0
    %v278 = vadd.f32 %v276, %v277
    %v279 = vsel %vm269, %v262, 0.0
    %v280 = vadd.f32 %v278, %v279
    %v281 = vsel %vm269, %v263, 0.0
    %v282 = vadd.f32 %v280, %v281
    %v283 = vsel %vm269, %v264, 0.0
    %v284 = vadd.f32 %v282, %v283
    %v285 = vsel %vm269, %v265, 0.0
    %v286 = vadd.f32 %v284, %v285
    %v287 = vsel %vm269, %v266, 0.0
    %v288 = vadd.f32 %v286, %v287
    %v289 = vsel %vm269, %v267, 0.0
    %v290 = vadd.f32 %v288, %v289
    %v291 = vsel %vm269, %v268, 0.0
    %v292 = vadd.f32 %v290, %v291
    %293 = vadd.xlane.f32.xlu0 %v292
    %v294 = vpop.xlane.xlu0 %293
    %v295 = vrot.slane %v294, 4
    %v296 = vadd.f32 %v294, %v295
    %v297 = vrot.slane %v296, 2
    %v298 = vadd.f32 %v296, %v297
    %v299 = vrot.slane %v298, 1
    %v300 = vadd.f32 %v298, %v299
    %s301 = vtos %v300
    %v302 = vadd.f32 %v59, %v63
    %v303 = vadd.f32 %v302, %v67
    %v304 = vadd.f32 %v60, %v64
    %v305 = vadd.f32 %v304, %v68
    %v306 = vadd.f32 %v61, %v65
    %v307 = vadd.f32 %v306, %v69
    %v308 = vadd.f32 %v62, %v66
    %v309 = vadd.f32 %v308, %v70
    %vm310 = vcmp.eq.f32.partialorder %v59, 0.0
    %vm311 = vcmp.eq.f32.partialorder %v60, 0.0
    %vm312 = vcmp.eq.f32.partialorder %v61, 0.0
    %vm313 = vcmp.eq.f32.partialorder %v62, 0.0
    %vm314 = vcmp.eq.f32.partialorder %v63, 0.0
    %vm315 = vcmp.eq.f32.partialorder %v64, 0.0
    %vm316 = vcmp.eq.f32.partialorder %v65, 0.0
    %vm317 = vcmp.eq.f32.partialorder %v66, 0.0
    %vm318 = vcmp.eq.f32.partialorder %v67, 0.0
    %vm319 = vcmp.eq.f32.partialorder %v68, 0.0
    %vm320 = vcmp.eq.f32.partialorder %v69, 0.0
    %vm321 = vcmp.eq.f32.partialorder %v70, 0.0
    %v322 = vlog2.pop %v59
    %v323 = vmul.f32 %v322, 0.6931472
    %v324 = vlog2.pop %v60
    %v325 = vmul.f32 %v324, 0.6931472
    %v326 = vlog2.pop %v61
    %v327 = vmul.f32 %v326, 0.6931472
    %v328 = vlog2.pop %v62
    %v329 = vmul.f32 %v328, 0.6931472
    %v330 = vlog2.pop %v63
    %v331 = vmul.f32 %v330, 0.6931472
    %v332 = vlog2.pop %v64
    %v333 = vmul.f32 %v332, 0.6931472
    %v334 = vlog2.pop %v65
    %v335 = vmul.f32 %v334, 0.6931472
    %v336 = vlog2.pop %v66
    %v337 = vmul.f32 %v336, 0.6931472
    %v338 = vlog2.pop %v67
    %v339 = vmul.f32 %v338, 0.6931472
    %v340 = vlog2.pop %v68
    %v341 = vmul.f32 %v340, 0.6931472
    %v342 = vlog2.pop %v69
    %v343 = vmul.f32 %v342, 0.6931472
    %v344 = vlog2.pop %v70
    %v345 = vmul.f32 %v344, 0.6931472
    %v346 = vmul.f32 %v59, %v323
    %v347 = vmul.f32 %v60, %v325
    %v348 = vmul.f32 %v61, %v327
    %v349 = vmul.f32 %v62, %v329
    %v350 = vmul.f32 %v63, %v331
    %v351 = vmul.f32 %v64, %v333
    %v352 = vmul.f32 %v65, %v335
    %v353 = vmul.f32 %v66, %v337
    %v354 = vmul.f32 %v67, %v339
    %v355 = vmul.f32 %v68, %v341
    %v356 = vmul.f32 %v69, %v343
    %v357 = vmul.f32 %v70, %v345
    %v358 = vsel %vm310, 0.0, %v346
    %v359 = vsel %vm311, 0.0, %v347
    %v360 = vsel %vm312, 0.0, %v348
    %v361 = vsel %vm313, 0.0, %v349
    %v362 = vsel %vm314, 0.0, %v350
    %v363 = vsel %vm315, 0.0, %v351
    %v364 = vsel %vm316, 0.0, %v352
    %v365 = vsel %vm317, 0.0, %v353
    %v366 = vsel %vm318, 0.0, %v354
    %v367 = vsel %vm319, 0.0, %v355
    %v368 = vsel %vm320, 0.0, %v356
    %v369 = vsel %vm321, 0.0, %v357
    %v370 = vadd.f32 %v358, %v359
    %v371 = vadd.f32 %v370, %v360
    %v372 = vadd.f32 %v371, %v361
    %v373 = vadd.f32 %v372, %v362
    %v374 = vadd.f32 %v373, %v363
    %v375 = vadd.f32 %v374, %v364
    %v376 = vadd.f32 %v375, %v365
    %v377 = vadd.f32 %v376, %v366
    %v378 = vadd.f32 %v377, %v367
    %v379 = vadd.f32 %v378, %v368
    %v380 = vadd.f32 %v379, %v369
    %381 = vadd.xlane.f32.xlu0 %v380
    %v382 = vpop.xlane.xlu0 %381
    %v383 = vrot.slane %v382, 4
    %v384 = vadd.f32 %v382, %v383
    %v385 = vrot.slane %v384, 2
    %v386 = vadd.f32 %v384, %v385
    %v387 = vrot.slane %v386, 1
    %v388 = vadd.f32 %v386, %v387
    %s389 = vtos %v388
    %v390 = vmul.f32 %v303, %v303
    %v391 = vmul.f32 %v305, %v305
    %v392 = vmul.f32 %v307, %v307
    %v393 = vmul.f32 %v309, %v309
    %v394 = vadd.f32 %v390, %v391
    %v395 = vadd.f32 %v394, %v392
    %v396 = vadd.f32 %v395, %v393
    %397 = vadd.xlane.f32.xlu0 %v396
    %v398 = vpop.xlane.xlu0 %397
    %v399 = vrot.slane %v398, 4
    %v400 = vadd.f32 %v398, %v399
    %v401 = vrot.slane %v400, 2
    %v402 = vadd.f32 %v400, %v401
    %v403 = vrot.slane %v402, 1
    %v404 = vadd.f32 %v402, %v403
    %s405 = vtos %v404
    %v406 = vmul.f32 %v59, %v59
    %v407 = vmul.f32 %v60, %v60
    %v408 = vmul.f32 %v61, %v61
    %v409 = vmul.f32 %v62, %v62
    %v410 = vmul.f32 %v63, %v63
    %v411 = vmul.f32 %v64, %v64
    %v412 = vmul.f32 %v65, %v65
    %v413 = vmul.f32 %v66, %v66
    %v414 = vmul.f32 %v67, %v67
    %v415 = vmul.f32 %v68, %v68
    %v416 = vmul.f32 %v69, %v69
    %v417 = vmul.f32 %v70, %v70
    %v418 = vadd.f32 %v406, %v407
    %v419 = vadd.f32 %v418, %v408
    %v420 = vadd.f32 %v419, %v409
    %v421 = vadd.f32 %v420, %v410
    %v422 = vadd.f32 %v421, %v411
    %v423 = vadd.f32 %v422, %v412
    %v424 = vadd.f32 %v423, %v413
    %v425 = vadd.f32 %v424, %v414
    %v426 = vadd.f32 %v425, %v415
    %v427 = vadd.f32 %v426, %v416
    %v428 = vadd.f32 %v427, %v417
    %429 = vadd.xlane.f32.xlu0 %v428
    %v430 = vpop.xlane.xlu0 %429
    %v431 = vrot.slane %v430, 4
    %v432 = vadd.f32 %v430, %v431
    %v433 = vrot.slane %v432, 2
    %v434 = vadd.f32 %v432, %v433
    %v435 = vrot.slane %v434, 1
    %v436 = vadd.f32 %v434, %v435
    %s437 = vtos %v436
    %s438 = ssub.f32 %s405, %s437
    %v439 = vrcp.pop 2.0
    %s440 = vtos %v439
    %s441 = smul.f32 %s438, %s440
    %s442 = ssub.f32 %s389, %s441
    %v443 = vrcp.pop 32.0
    %s444 = vtos %v443
    %s445 = smul.f32 %s301, %s444
    %v446 = vrcp.pop 4096.0
    %s447 = vtos %v446
    %s448 = smul.f32 %s442, %s447
    %s449 = sadd.f32 %s445, %s448
    %v450 = vrcp.pop 3.0
    %s451 = vtos %v450
    %s452 = smul.f32 %s449, %s451
    %v453 = vld [vmem:[#allocation5] sm:$0xff]
    %v454 = vstv %s452
    %v455 = vadd.f32 %v453, %v454
    %456 = vst [vmem:[#allocation5] sm:$0xff] %v455
    // Predicated region
    $region18: #{tpu_custom_call.1} parent=1 // pred_check
      _
    $region19: #{tpu_custom_call.1} parent=1 // pred_check_branch
      %458 = sbr.rel (0) target = $region21
    $region20: #{tpu_custom_call.1} parent=1 // pred_region
      %s460 = ssub.s32 128, 128
      %461 = vsyncadd [#allocation4], %s460
      %s463 = sshll.u32 [#allocation5], 4
      %s464 = int_to_ptr.vmem [resolvable:$true] %s463
      %466 = dma.vmem_to_hbm [thread:$0]  %s464, 128, %s2, [#allocation4]
    $region21: #{tpu_custom_call.1} parent=1 // pred_fallthru
      _
    // Predicated region
    $region22: #{tpu_custom_call.1} parent=1 // pred_check
      _
    $region23: #{tpu_custom_call.1} parent=1 // pred_check_branch
      %468 = sbr.rel (0) target = $region25
    $region24: #{tpu_custom_call.1} parent=1 // pred_region
      %469 = dma.done [#allocation4], 128
    $region25: #{tpu_custom_call.1} parent=1 // pred_fallthru
      _
    %470 = vsyncpa [#allocation3], 1
    %471 = vsyncpa [#allocation4], 1

</llo_original>
